<compile_context>
chip_gen: v6e
topology: v6e:2x2x1
jax: 0.10.0
libtpu: 0.0.40
codegen_flags: <defaults>
</compile_context>

<pallas_src>
import jax
import jax.numpy as jnp
from jax.experimental import pallas as pl
from jax.experimental.pallas import tpu as pltpu


def _round_up(x, m):
    return ((x + m - 1) // m) * m


def _round_down(x, m):
    return (x // m) * m


def _attention_block_kernel(w1_ref, w2_ref, x_ref, o_ref):
    # w1_ref: SMEM (Cin, Cout) f32 scalars
    # w2_ref: SMEM (Cout, 1)   f32 scalars
    # x_ref : VMEM (1, Cin, tP) current tile (spatial on lanes)
    # o_ref : VMEM (1, Cin, tP)
    x = x_ref[0].astype(jnp.float32)          # (Cin, tP)
    cin = x.shape[0]
    cout = w1_ref.shape[1]

    # conv1 (1x1) + ReLU + conv2 (1x1), fully unrolled as VPU scalar*vector FMAs.
    acc = None
    for o in range(cout):
        h = w1_ref[0, o] * x[0:1, :]          # (1, tP)
        for c in range(1, cin):
            h = h + w1_ref[c, o] * x[c:c + 1, :]
        h = jnp.maximum(h, 0.0)
        term = w2_ref[o, 0] * h
        acc = term if acc is None else acc + term

    att = jax.nn.sigmoid(acc)                 # (1, tP), EUP

    # Gate the input: sublane-broadcast of the per-pixel attention scalar.
    o_ref[0] = (x * att).astype(o_ref.dtype)


def attention_block(x_nchw, w1, w2, *, tp=None):
    """x_nchw: (N, Cin, H, W); w1: (Cin, Cout); w2: (Cout, 1)."""
    n, cin, h, w = x_nchw.shape
    cout = w1.shape[1]
    assert w1.shape == (cin, cout) and w2.shape == (cout, 1)

    p = h * w
    # Free reshape of contiguous NCHW -> (N, Cin, P): no transpose, no HBM copy.
    x3 = x_nchw.reshape(n, cin, p)

    LANE = 128
    itemsize = jnp.dtype(x_nchw.dtype).itemsize
    if tp is None:
        # Target ~512 KiB per input block (lane-aligned); with input+output
        # double-buffered that is ~2 MiB of VMEM, well under the default
        # scoped limit on v5e (16 MiB), v6e (32 MiB) and v7x (32 MiB).
        target_cols = (512 * 1024) // max(1, cin * itemsize)
        tp = min(_round_up(p, LANE), max(LANE, _round_down(target_cols, LANE)))
    tp = max(LANE, _round_up(tp, LANE))

    # Pad the spatial axis so tp divides it (arbitrary N*H*W supported).
    # Padded columns compute 0 * sigmoid(0) = 0 and are sliced off afterwards.
    p_pad = _round_up(p, tp)
    if p_pad != p:
        x3 = jnp.pad(x3, ((0, 0), (0, 0), (0, p_pad - p)))

    grid = (n, p_pad // tp)

    # Weights go to SMEM once (32-bit scalars); cast to f32 for scalar reads.
    w1_f32 = w1.astype(jnp.float32)
    w2_f32 = w2.astype(jnp.float32)

    out3 = pl.pallas_call(
        _attention_block_kernel,
        out_shape=jax.ShapeDtypeStruct((n, cin, p_pad), x_nchw.dtype),
        grid_spec=pltpu.PrefetchScalarGridSpec(
            num_scalar_prefetch=0,
            grid=grid,
            in_specs=[
                pl.BlockSpec(memory_space=pltpu.MemorySpace.SMEM),   # w1
                pl.BlockSpec(memory_space=pltpu.MemorySpace.SMEM),   # w2
                pl.BlockSpec((1, cin, tp), lambda i, j: (i, 0, j)),  # x tile
            ],
            out_specs=pl.BlockSpec((1, cin, tp), lambda i, j: (i, 0, j)),
        ),
        compiler_params=pltpu.CompilerParams(
            dimension_semantics=("parallel", "parallel"),
        ),
    )(w1_f32, w2_f32, x3)

    if p_pad != p:
        out3 = out3[:, :, :p]
    return out3.reshape(n, cin, h, w)


def _reference(x_nchw, w1, w2):
    # Pure-JAX reference mirroring the PyTorch forward.
    h = jnp.einsum("nchw,co->nohw", x_nchw, w1)
    h = jnp.maximum(h, 0.0)
    a = jnp.einsum("nohw,ok->nkhw", h, w2)
    a = jax.nn.sigmoid(a)
    return x_nchw * a


if __name__ == "__main__":
    # Small shapes consistent with the module: batch=2, in_channels=4,
    # out_channels=8, spatial=16x16.
    N, CIN, COUT, H, W = 2, 4, 8, 16, 16

    key = jax.random.PRNGKey(0)
    kx, k1, k2 = jax.random.split(key, 3)

    x = jax.random.normal(kx, (N, CIN, H, W), dtype=jnp.float32)
    # Channel-mixing matrices (PyTorch conv1.weight is (COUT, CIN, 1, 1); here
    # they are stored pre-transposed as (CIN, COUT) / (COUT, 1)).
    w1 = jax.random.normal(k1, (CIN, COUT), dtype=jnp.float32) * 0.1
    w2 = jax.random.normal(k2, (COUT, 1), dtype=jnp.float32) * 0.1

    out = attention_block(x, w1, w2)
    out = jax.block_until_ready(out)

    ref = _reference(x, w1, w2)
    assert out.shape == (N, CIN, H, W)
    assert jnp.allclose(out, ref, atol=1e-5, rtol=1e-5)

    print("KERNEL_OK")
</pallas_src>

<mosaic_0001>
module attributes {stable_mosaic.version = 11 : i64} {
  func.func @_attention_block_kernel(%arg0: i32, %arg1: i32, %arg2: memref<4x8xf32, #tpu.memory_space<smem>>, %arg3: memref<8x1xf32, #tpu.memory_space<smem>>, %arg4: memref<1x4x256xf32, #tpu.memory_space<vmem>>, %arg5: memref<1x4x256xf32, #tpu.memory_space<vmem>>) attributes {dimension_semantics = [#tpu.dimension_semantics<parallel>, #tpu.dimension_semantics<parallel>], iteration_bounds = array<i64: 2, 1>, scalar_prefetch = 0 : i64, scratch_operands = 0 : i64, tpu.core_type = #tpu.core_type<tc>, window_params = [{transform_indices = @transform_0, window_bounds = array<i64: 4, 8>}, {transform_indices = @transform_1, window_bounds = array<i64: 8, 1>}, {transform_indices = @transform_2, window_bounds = array<i64: 1, 4, 256>}, {transform_indices = @transform_3, window_bounds = array<i64: 1, 4, 256>}]} {
    %c0 = arith.constant 0 : index
    %c0_0 = arith.constant 0 : index
    %c0_1 = arith.constant 0 : index
    %0 = vector.load %arg4[%c0, %c0_0, %c0_1] : memref<1x4x256xf32, #tpu.memory_space<vmem>>, vector<1x4x256xf32>
    %1 = vector.shape_cast %0 : vector<1x4x256xf32> to vector<4x256xf32>
    %c0_2 = arith.constant 0 : index
    %c0_3 = arith.constant 0 : index
    %2 = memref.load %arg2[%c0_2, %c0_3] : memref<4x8xf32, #tpu.memory_space<smem>>
    %3 = vector.extract_strided_slice %1 {offsets = [0, 0], sizes = [1, 256], strides = [1, 1]} : vector<4x256xf32> to vector<1x256xf32>
    %4 = vector.broadcast %2 : f32 to vector<1x256xf32>
    %5 = arith.mulf %4, %3 : vector<1x256xf32>
    %c1 = arith.constant 1 : index
    %c0_4 = arith.constant 0 : index
    %6 = memref.load %arg2[%c1, %c0_4] : memref<4x8xf32, #tpu.memory_space<smem>>
    %7 = vector.extract_strided_slice %1 {offsets = [1, 0], sizes = [1, 256], strides = [1, 1]} : vector<4x256xf32> to vector<1x256xf32>
    %8 = vector.broadcast %6 : f32 to vector<1x256xf32>
    %9 = arith.mulf %8, %7 : vector<1x256xf32>
    %10 = arith.addf %5, %9 : vector<1x256xf32>
    %c2 = arith.constant 2 : index
    %c0_5 = arith.constant 0 : index
    %11 = memref.load %arg2[%c2, %c0_5] : memref<4x8xf32, #tpu.memory_space<smem>>
    %12 = vector.extract_strided_slice %1 {offsets = [2, 0], sizes = [1, 256], strides = [1, 1]} : vector<4x256xf32> to vector<1x256xf32>
    %13 = vector.broadcast %11 : f32 to vector<1x256xf32>
    %14 = arith.mulf %13, %12 : vector<1x256xf32>
    %15 = arith.addf %10, %14 : vector<1x256xf32>
    %c3 = arith.constant 3 : index
    %c0_6 = arith.constant 0 : index
    %16 = memref.load %arg2[%c3, %c0_6] : memref<4x8xf32, #tpu.memory_space<smem>>
    %17 = vector.extract_strided_slice %1 {offsets = [3, 0], sizes = [1, 256], strides = [1, 1]} : vector<4x256xf32> to vector<1x256xf32>
    %18 = vector.broadcast %16 : f32 to vector<1x256xf32>
    %19 = arith.mulf %18, %17 : vector<1x256xf32>
    %20 = arith.addf %15, %19 : vector<1x256xf32>
    %cst = arith.constant 0.000000e+00 : f32
    %21 = vector.broadcast %cst : f32 to vector<1x256xf32>
    %22 = arith.maximumf %20, %21 : vector<1x256xf32>
    %c0_7 = arith.constant 0 : index
    %c0_8 = arith.constant 0 : index
    %23 = memref.load %arg3[%c0_7, %c0_8] : memref<8x1xf32, #tpu.memory_space<smem>>
    %24 = vector.broadcast %23 : f32 to vector<1x256xf32>
    %25 = arith.mulf %24, %22 : vector<1x256xf32>
    %c0_9 = arith.constant 0 : index
    %c1_10 = arith.constant 1 : index
    %26 = memref.load %arg2[%c0_9, %c1_10] : memref<4x8xf32, #tpu.memory_space<smem>>
    %27 = vector.extract_strided_slice %1 {offsets = [0, 0], sizes = [1, 256], strides = [1, 1]} : vector<4x256xf32> to vector<1x256xf32>
    %28 = vector.broadcast %26 : f32 to vector<1x256xf32>
    %29 = arith.mulf %28, %27 : vector<1x256xf32>
    %c1_11 = arith.constant 1 : index
    %c1_12 = arith.constant 1 : index
    %30 = memref.load %arg2[%c1_11, %c1_12] : memref<4x8xf32, #tpu.memory_space<smem>>
    %31 = vector.extract_strided_slice %1 {offsets = [1, 0], sizes = [1, 256], strides = [1, 1]} : vector<4x256xf32> to vector<1x256xf32>
    %32 = vector.broadcast %30 : f32 to vector<1x256xf32>
    %33 = arith.mulf %32, %31 : vector<1x256xf32>
    %34 = arith.addf %29, %33 : vector<1x256xf32>
    %c2_13 = arith.constant 2 : index
    %c1_14 = arith.constant 1 : index
    %35 = memref.load %arg2[%c2_13, %c1_14] : memref<4x8xf32, #tpu.memory_space<smem>>
    %36 = vector.extract_strided_slice %1 {offsets = [2, 0], sizes = [1, 256], strides = [1, 1]} : vector<4x256xf32> to vector<1x256xf32>
    %37 = vector.broadcast %35 : f32 to vector<1x256xf32>
    %38 = arith.mulf %37, %36 : vector<1x256xf32>
    %39 = arith.addf %34, %38 : vector<1x256xf32>
    %c3_15 = arith.constant 3 : index
    %c1_16 = arith.constant 1 : index
    %40 = memref.load %arg2[%c3_15, %c1_16] : memref<4x8xf32, #tpu.memory_space<smem>>
    %41 = vector.extract_strided_slice %1 {offsets = [3, 0], sizes = [1, 256], strides = [1, 1]} : vector<4x256xf32> to vector<1x256xf32>
    %42 = vector.broadcast %40 : f32 to vector<1x256xf32>
    %43 = arith.mulf %42, %41 : vector<1x256xf32>
    %44 = arith.addf %39, %43 : vector<1x256xf32>
    %cst_17 = arith.constant 0.000000e+00 : f32
    %45 = vector.broadcast %cst_17 : f32 to vector<1x256xf32>
    %46 = arith.maximumf %44, %45 : vector<1x256xf32>
    %c1_18 = arith.constant 1 : index
    %c0_19 = arith.constant 0 : index
    %47 = memref.load %arg3[%c1_18, %c0_19] : memref<8x1xf32, #tpu.memory_space<smem>>
    %48 = vector.broadcast %47 : f32 to vector<1x256xf32>
    %49 = arith.mulf %48, %46 : vector<1x256xf32>
    %50 = arith.addf %25, %49 : vector<1x256xf32>
    %c0_20 = arith.constant 0 : index
    %c2_21 = arith.constant 2 : index
    %51 = memref.load %arg2[%c0_20, %c2_21] : memref<4x8xf32, #tpu.memory_space<smem>>
    %52 = vector.extract_strided_slice %1 {offsets = [0, 0], sizes = [1, 256], strides = [1, 1]} : vector<4x256xf32> to vector<1x256xf32>
    %53 = vector.broadcast %51 : f32 to vector<1x256xf32>
    %54 = arith.mulf %53, %52 : vector<1x256xf32>
    %c1_22 = arith.constant 1 : index
    %c2_23 = arith.constant 2 : index
    %55 = memref.load %arg2[%c1_22, %c2_23] : memref<4x8xf32, #tpu.memory_space<smem>>
    %56 = vector.extract_strided_slice %1 {offsets = [1, 0], sizes = [1, 256], strides = [1, 1]} : vector<4x256xf32> to vector<1x256xf32>
    %57 = vector.broadcast %55 : f32 to vector<1x256xf32>
    %58 = arith.mulf %57, %56 : vector<1x256xf32>
    %59 = arith.addf %54, %58 : vector<1x256xf32>
    %c2_24 = arith.constant 2 : index
    %c2_25 = arith.constant 2 : index
    %60 = memref.load %arg2[%c2_24, %c2_25] : memref<4x8xf32, #tpu.memory_space<smem>>
    %61 = vector.extract_strided_slice %1 {offsets = [2, 0], sizes = [1, 256], strides = [1, 1]} : vector<4x256xf32> to vector<1x256xf32>
    %62 = vector.broadcast %60 : f32 to vector<1x256xf32>
    %63 = arith.mulf %62, %61 : vector<1x256xf32>
    %64 = arith.addf %59, %63 : vector<1x256xf32>
    %c3_26 = arith.constant 3 : index
    %c2_27 = arith.constant 2 : index
    %65 = memref.load %arg2[%c3_26, %c2_27] : memref<4x8xf32, #tpu.memory_space<smem>>
    %66 = vector.extract_strided_slice %1 {offsets = [3, 0], sizes = [1, 256], strides = [1, 1]} : vector<4x256xf32> to vector<1x256xf32>
    %67 = vector.broadcast %65 : f32 to vector<1x256xf32>
    %68 = arith.mulf %67, %66 : vector<1x256xf32>
    %69 = arith.addf %64, %68 : vector<1x256xf32>
    %cst_28 = arith.constant 0.000000e+00 : f32
    %70 = vector.broadcast %cst_28 : f32 to vector<1x256xf32>
    %71 = arith.maximumf %69, %70 : vector<1x256xf32>
    %c2_29 = arith.constant 2 : index
    %c0_30 = arith.constant 0 : index
    %72 = memref.load %arg3[%c2_29, %c0_30] : memref<8x1xf32, #tpu.memory_space<smem>>
    %73 = vector.broadcast %72 : f32 to vector<1x256xf32>
    %74 = arith.mulf %73, %71 : vector<1x256xf32>
    %75 = arith.addf %50, %74 : vector<1x256xf32>
    %c0_31 = arith.constant 0 : index
    %c3_32 = arith.constant 3 : index
    %76 = memref.load %arg2[%c0_31, %c3_32] : memref<4x8xf32, #tpu.memory_space<smem>>
    %77 = vector.extract_strided_slice %1 {offsets = [0, 0], sizes = [1, 256], strides = [1, 1]} : vector<4x256xf32> to vector<1x256xf32>
    %78 = vector.broadcast %76 : f32 to vector<1x256xf32>
    %79 = arith.mulf %78, %77 : vector<1x256xf32>
    %c1_33 = arith.constant 1 : index
    %c3_34 = arith.constant 3 : index
    %80 = memref.load %arg2[%c1_33, %c3_34] : memref<4x8xf32, #tpu.memory_space<smem>>
    %81 = vector.extract_strided_slice %1 {offsets = [1, 0], sizes = [1, 256], strides = [1, 1]} : vector<4x256xf32> to vector<1x256xf32>
    %82 = vector.broadcast %80 : f32 to vector<1x256xf32>
    %83 = arith.mulf %82, %81 : vector<1x256xf32>
    %84 = arith.addf %79, %83 : vector<1x256xf32>
    %c2_35 = arith.constant 2 : index
    %c3_36 = arith.constant 3 : index
    %85 = memref.load %arg2[%c2_35, %c3_36] : memref<4x8xf32, #tpu.memory_space<smem>>
    %86 = vector.extract_strided_slice %1 {offsets = [2, 0], sizes = [1, 256], strides = [1, 1]} : vector<4x256xf32> to vector<1x256xf32>
    %87 = vector.broadcast %85 : f32 to vector<1x256xf32>
    %88 = arith.mulf %87, %86 : vector<1x256xf32>
    %89 = arith.addf %84, %88 : vector<1x256xf32>
    %c3_37 = arith.constant 3 : index
    %c3_38 = arith.constant 3 : index
    %90 = memref.load %arg2[%c3_37, %c3_38] : memref<4x8xf32, #tpu.memory_space<smem>>
    %91 = vector.extract_strided_slice %1 {offsets = [3, 0], sizes = [1, 256], strides = [1, 1]} : vector<4x256xf32> to vector<1x256xf32>
    %92 = vector.broadcast %90 : f32 to vector<1x256xf32>
    %93 = arith.mulf %92, %91 : vector<1x256xf32>
    %94 = arith.addf %89, %93 : vector<1x256xf32>
    %cst_39 = arith.constant 0.000000e+00 : f32
    %95 = vector.broadcast %cst_39 : f32 to vector<1x256xf32>
    %96 = arith.maximumf %94, %95 : vector<1x256xf32>
    %c3_40 = arith.constant 3 : index
    %c0_41 = arith.constant 0 : index
    %97 = memref.load %arg3[%c3_40, %c0_41] : memref<8x1xf32, #tpu.memory_space<smem>>
    %98 = vector.broadcast %97 : f32 to vector<1x256xf32>
    %99 = arith.mulf %98, %96 : vector<1x256xf32>
    %100 = arith.addf %75, %99 : vector<1x256xf32>
    %c0_42 = arith.constant 0 : index
    %c4 = arith.constant 4 : index
    %101 = memref.load %arg2[%c0_42, %c4] : memref<4x8xf32, #tpu.memory_space<smem>>
    %102 = vector.extract_strided_slice %1 {offsets = [0, 0], sizes = [1, 256], strides = [1, 1]} : vector<4x256xf32> to vector<1x256xf32>
    %103 = vector.broadcast %101 : f32 to vector<1x256xf32>
    %104 = arith.mulf %103, %102 : vector<1x256xf32>
    %c1_43 = arith.constant 1 : index
    %c4_44 = arith.constant 4 : index
    %105 = memref.load %arg2[%c1_43, %c4_44] : memref<4x8xf32, #tpu.memory_space<smem>>
    %106 = vector.extract_strided_slice %1 {offsets = [1, 0], sizes = [1, 256], strides = [1, 1]} : vector<4x256xf32> to vector<1x256xf32>
    %107 = vector.broadcast %105 : f32 to vector<1x256xf32>
    %108 = arith.mulf %107, %106 : vector<1x256xf32>
    %109 = arith.addf %104, %108 : vector<1x256xf32>
    %c2_45 = arith.constant 2 : index
    %c4_46 = arith.constant 4 : index
    %110 = memref.load %arg2[%c2_45, %c4_46] : memref<4x8xf32, #tpu.memory_space<smem>>
    %111 = vector.extract_strided_slice %1 {offsets = [2, 0], sizes = [1, 256], strides = [1, 1]} : vector<4x256xf32> to vector<1x256xf32>
    %112 = vector.broadcast %110 : f32 to vector<1x256xf32>
    %113 = arith.mulf %112, %111 : vector<1x256xf32>
    %114 = arith.addf %109, %113 : vector<1x256xf32>
    %c3_47 = arith.constant 3 : index
    %c4_48 = arith.constant 4 : index
    %115 = memref.load %arg2[%c3_47, %c4_48] : memref<4x8xf32, #tpu.memory_space<smem>>
    %116 = vector.extract_strided_slice %1 {offsets = [3, 0], sizes = [1, 256], strides = [1, 1]} : vector<4x256xf32> to vector<1x256xf32>
    %117 = vector.broadcast %115 : f32 to vector<1x256xf32>
    %118 = arith.mulf %117, %116 : vector<1x256xf32>
    %119 = arith.addf %114, %118 : vector<1x256xf32>
    %cst_49 = arith.constant 0.000000e+00 : f32
    %120 = vector.broadcast %cst_49 : f32 to vector<1x256xf32>
    %121 = arith.maximumf %119, %120 : vector<1x256xf32>
    %c4_50 = arith.constant 4 : index
    %c0_51 = arith.constant 0 : index
    %122 = memref.load %arg3[%c4_50, %c0_51] : memref<8x1xf32, #tpu.memory_space<smem>>
    %123 = vector.broadcast %122 : f32 to vector<1x256xf32>
    %124 = arith.mulf %123, %121 : vector<1x256xf32>
    %125 = arith.addf %100, %124 : vector<1x256xf32>
    %c0_52 = arith.constant 0 : index
    %c5 = arith.constant 5 : index
    %126 = memref.load %arg2[%c0_52, %c5] : memref<4x8xf32, #tpu.memory_space<smem>>
    %127 = vector.extract_strided_slice %1 {offsets = [0, 0], sizes = [1, 256], strides = [1, 1]} : vector<4x256xf32> to vector<1x256xf32>
    %128 = vector.broadcast %126 : f32 to vector<1x256xf32>
    %129 = arith.mulf %128, %127 : vector<1x256xf32>
    %c1_53 = arith.constant 1 : index
    %c5_54 = arith.constant 5 : index
    %130 = memref.load %arg2[%c1_53, %c5_54] : memref<4x8xf32, #tpu.memory_space<smem>>
    %131 = vector.extract_strided_slice %1 {offsets = [1, 0], sizes = [1, 256], strides = [1, 1]} : vector<4x256xf32> to vector<1x256xf32>
    %132 = vector.broadcast %130 : f32 to vector<1x256xf32>
    %133 = arith.mulf %132, %131 : vector<1x256xf32>
    %134 = arith.addf %129, %133 : vector<1x256xf32>
    %c2_55 = arith.constant 2 : index
    %c5_56 = arith.constant 5 : index
    %135 = memref.load %arg2[%c2_55, %c5_56] : memref<4x8xf32, #tpu.memory_space<smem>>
    %136 = vector.extract_strided_slice %1 {offsets = [2, 0], sizes = [1, 256], strides = [1, 1]} : vector<4x256xf32> to vector<1x256xf32>
    %137 = vector.broadcast %135 : f32 to vector<1x256xf32>
    %138 = arith.mulf %137, %136 : vector<1x256xf32>
    %139 = arith.addf %134, %138 : vector<1x256xf32>
    %c3_57 = arith.constant 3 : index
    %c5_58 = arith.constant 5 : index
    %140 = memref.load %arg2[%c3_57, %c5_58] : memref<4x8xf32, #tpu.memory_space<smem>>
    %141 = vector.extract_strided_slice %1 {offsets = [3, 0], sizes = [1, 256], strides = [1, 1]} : vector<4x256xf32> to vector<1x256xf32>
    %142 = vector.broadcast %140 : f32 to vector<1x256xf32>
    %143 = arith.mulf %142, %141 : vector<1x256xf32>
    %144 = arith.addf %139, %143 : vector<1x256xf32>
    %cst_59 = arith.constant 0.000000e+00 : f32
    %145 = vector.broadcast %cst_59 : f32 to vector<1x256xf32>
    %146 = arith.maximumf %144, %145 : vector<1x256xf32>
    %c5_60 = arith.constant 5 : index
    %c0_61 = arith.constant 0 : index
    %147 = memref.load %arg3[%c5_60, %c0_61] : memref<8x1xf32, #tpu.memory_space<smem>>
    %148 = vector.broadcast %147 : f32 to vector<1x256xf32>
    %149 = arith.mulf %148, %146 : vector<1x256xf32>
    %150 = arith.addf %125, %149 : vector<1x256xf32>
    %c0_62 = arith.constant 0 : index
    %c6 = arith.constant 6 : index
    %151 = memref.load %arg2[%c0_62, %c6] : memref<4x8xf32, #tpu.memory_space<smem>>
    %152 = vector.extract_strided_slice %1 {offsets = [0, 0], sizes = [1, 256], strides = [1, 1]} : vector<4x256xf32> to vector<1x256xf32>
    %153 = vector.broadcast %151 : f32 to vector<1x256xf32>
    %154 = arith.mulf %153, %152 : vector<1x256xf32>
    %c1_63 = arith.constant 1 : index
    %c6_64 = arith.constant 6 : index
    %155 = memref.load %arg2[%c1_63, %c6_64] : memref<4x8xf32, #tpu.memory_space<smem>>
    %156 = vector.extract_strided_slice %1 {offsets = [1, 0], sizes = [1, 256], strides = [1, 1]} : vector<4x256xf32> to vector<1x256xf32>
    %157 = vector.broadcast %155 : f32 to vector<1x256xf32>
    %158 = arith.mulf %157, %156 : vector<1x256xf32>
    %159 = arith.addf %154, %158 : vector<1x256xf32>
    %c2_65 = arith.constant 2 : index
    %c6_66 = arith.constant 6 : index
    %160 = memref.load %arg2[%c2_65, %c6_66] : memref<4x8xf32, #tpu.memory_space<smem>>
    %161 = vector.extract_strided_slice %1 {offsets = [2, 0], sizes = [1, 256], strides = [1, 1]} : vector<4x256xf32> to vector<1x256xf32>
    %162 = vector.broadcast %160 : f32 to vector<1x256xf32>
    %163 = arith.mulf %162, %161 : vector<1x256xf32>
    %164 = arith.addf %159, %163 : vector<1x256xf32>
    %c3_67 = arith.constant 3 : index
    %c6_68 = arith.constant 6 : index
    %165 = memref.load %arg2[%c3_67, %c6_68] : memref<4x8xf32, #tpu.memory_space<smem>>
    %166 = vector.extract_strided_slice %1 {offsets = [3, 0], sizes = [1, 256], strides = [1, 1]} : vector<4x256xf32> to vector<1x256xf32>
    %167 = vector.broadcast %165 : f32 to vector<1x256xf32>
    %168 = arith.mulf %167, %166 : vector<1x256xf32>
    %169 = arith.addf %164, %168 : vector<1x256xf32>
    %cst_69 = arith.constant 0.000000e+00 : f32
    %170 = vector.broadcast %cst_69 : f32 to vector<1x256xf32>
    %171 = arith.maximumf %169, %170 : vector<1x256xf32>
    %c6_70 = arith.constant 6 : index
    %c0_71 = arith.constant 0 : index
    %172 = memref.load %arg3[%c6_70, %c0_71] : memref<8x1xf32, #tpu.memory_space<smem>>
    %173 = vector.broadcast %172 : f32 to vector<1x256xf32>
    %174 = arith.mulf %173, %171 : vector<1x256xf32>
    %175 = arith.addf %150, %174 : vector<1x256xf32>
    %c0_72 = arith.constant 0 : index
    %c7 = arith.constant 7 : index
    %176 = memref.load %arg2[%c0_72, %c7] : memref<4x8xf32, #tpu.memory_space<smem>>
    %177 = vector.extract_strided_slice %1 {offsets = [0, 0], sizes = [1, 256], strides = [1, 1]} : vector<4x256xf32> to vector<1x256xf32>
    %178 = vector.broadcast %176 : f32 to vector<1x256xf32>
    %179 = arith.mulf %178, %177 : vector<1x256xf32>
    %c1_73 = arith.constant 1 : index
    %c7_74 = arith.constant 7 : index
    %180 = memref.load %arg2[%c1_73, %c7_74] : memref<4x8xf32, #tpu.memory_space<smem>>
    %181 = vector.extract_strided_slice %1 {offsets = [1, 0], sizes = [1, 256], strides = [1, 1]} : vector<4x256xf32> to vector<1x256xf32>
    %182 = vector.broadcast %180 : f32 to vector<1x256xf32>
    %183 = arith.mulf %182, %181 : vector<1x256xf32>
    %184 = arith.addf %179, %183 : vector<1x256xf32>
    %c2_75 = arith.constant 2 : index
    %c7_76 = arith.constant 7 : index
    %185 = memref.load %arg2[%c2_75, %c7_76] : memref<4x8xf32, #tpu.memory_space<smem>>
    %186 = vector.extract_strided_slice %1 {offsets = [2, 0], sizes = [1, 256], strides = [1, 1]} : vector<4x256xf32> to vector<1x256xf32>
    %187 = vector.broadcast %185 : f32 to vector<1x256xf32>
    %188 = arith.mulf %187, %186 : vector<1x256xf32>
    %189 = arith.addf %184, %188 : vector<1x256xf32>
    %c3_77 = arith.constant 3 : index
    %c7_78 = arith.constant 7 : index
    %190 = memref.load %arg2[%c3_77, %c7_78] : memref<4x8xf32, #tpu.memory_space<smem>>
    %191 = vector.extract_strided_slice %1 {offsets = [3, 0], sizes = [1, 256], strides = [1, 1]} : vector<4x256xf32> to vector<1x256xf32>
    %192 = vector.broadcast %190 : f32 to vector<1x256xf32>
    %193 = arith.mulf %192, %191 : vector<1x256xf32>
    %194 = arith.addf %189, %193 : vector<1x256xf32>
    %cst_79 = arith.constant 0.000000e+00 : f32
    %195 = vector.broadcast %cst_79 : f32 to vector<1x256xf32>
    %196 = arith.maximumf %194, %195 : vector<1x256xf32>
    %c7_80 = arith.constant 7 : index
    %c0_81 = arith.constant 0 : index
    %197 = memref.load %arg3[%c7_80, %c0_81] : memref<8x1xf32, #tpu.memory_space<smem>>
    %198 = vector.broadcast %197 : f32 to vector<1x256xf32>
    %199 = arith.mulf %198, %196 : vector<1x256xf32>
    %200 = arith.addf %175, %199 : vector<1x256xf32>
    %201 = arith.negf %200 : vector<1x256xf32>
    %202 = math.exp %201 : vector<1x256xf32>
    %cst_82 = arith.constant 1.000000e+00 : f32
    %203 = vector.broadcast %cst_82 : f32 to vector<1x256xf32>
    %204 = arith.addf %203, %202 : vector<1x256xf32>
    %205 = arith.divf %203, %204 : vector<1x256xf32>
    %206 = vector.broadcast %205 : vector<1x256xf32> to vector<4x256xf32>
    %207 = arith.mulf %1, %206 : vector<4x256xf32>
    %c0_83 = arith.constant 0 : index
    %c0_84 = arith.constant 0 : index
    %c0_85 = arith.constant 0 : index
    %208 = vector.load %arg5[%c0_83, %c0_84, %c0_85] : memref<1x4x256xf32, #tpu.memory_space<vmem>>, vector<1x4x256xf32>
    %209 = vector.shape_cast %208 : vector<1x4x256xf32> to vector<4x256xf32>
    %210 = vector.shape_cast %207 : vector<4x256xf32> to vector<1x4x256xf32>
    tpu.vector_store %arg5[%c0_83, %c0_84, %c0_85], %210 {strides = array<i32>} : memref<1x4x256xf32, #tpu.memory_space<vmem>>, vector<1x4x256xf32>,
    return
  }
  func.func @transform_0(%arg0: i32, %arg1: i32) -> (i32, i32) {
    %c0_i32 = arith.constant 0 : i32
    %c0_i32_0 = arith.constant 0 : i32
    %c0_i32_1 = arith.constant 0 : i32
    return %c0_i32, %c0_i32_0 : i32, i32
  }
  func.func @transform_1(%arg0: i32, %arg1: i32) -> (i32, i32) {
    %c0_i32 = arith.constant 0 : i32
    %c0_i32_0 = arith.constant 0 : i32
    %c0_i32_1 = arith.constant 0 : i32
    return %c0_i32, %c0_i32_0 : i32, i32
  }
  func.func @transform_2(%arg0: i32, %arg1: i32) -> (i32, i32, i32) {
    %c0_i32 = arith.constant 0 : i32
    %c0_i32_0 = arith.constant 0 : i32
    return %arg0, %c0_i32, %arg1 : i32, i32, i32
  }
  func.func @transform_3(%arg0: i32, %arg1: i32) -> (i32, i32, i32) {
    %c0_i32 = arith.constant 0 : i32
    %c0_i32_0 = arith.constant 0 : i32
    return %arg0, %c0_i32, %arg1 : i32, i32, i32
  }
}

</mosaic_0001>

<llo_original>
// kernel: tpu_custom_call.1
$region0: #{tpu_custom_call.1}
  #allocation0 [shape = 'u32[]', space=smem, size = 0x4, offset = 0x4, fixed_abs, tag = 'smem constant byte address 0x4 - core index']
  #allocation1 [shape = 'u32[144,128]{1,0:T(1,128)}', space=vmem, size = 0x12000, scoped, tag = 'internal scratch']
  %s0 = inlined_call_operand.vmem [shape: f32[4,8], index: 0, kind: input, shape index: {}]
  %s1 = inlined_call_operand.vmem [shape: f32[8,1], index: 1, kind: input, shape index: {}]
  %s2 = inlined_call_operand.hbm [shape: f32[2,4,256], index: 2, kind: input, shape index: {}]
  %s3 = inlined_call_operand.hbm [shape: f32[2,4,256], index: 3, kind: output, shape index: {}]
  %s4 = sld [smem:[#allocation0]]
  $region57: #{tpu_custom_call.1} parent=0
    _
  %s6 = ssub.s32 1, %s4
  %s7 = scalar_select 0, %s6, %s4
  $region1: #{tpu_custom_call.1} parent=0
    #allocation2 [shape = 'u8[2048]{0}', space=smem, size = 0x800, scoped, tag = 'input window, operand 0, single buffered']
    #allocation3 [shape = 's32[2]{0}', space=sflag, size = 0x8, scoped, tag = 'scoped memory for tpu_custom_call.1']
    #allocation4 [shape = 's32[2]{0}', space=sflag, size = 0x8, scoped, tag = 'scoped memory for tpu_custom_call.1']
    #allocation5 [shape = 's32[2]{0}', space=sflag, size = 0x8, scoped, tag = 'scoped memory for tpu_custom_call.1']
    #allocation6 [shape = 'u8[4096]{0}', space=smem, size = 0x1000, scoped, tag = 'input window, operand 1, single buffered']
    #allocation7 [shape = 's32[1]{0}', space=sflag, size = 0x4, scoped, tag = 'scoped memory for tpu_custom_call.1']
    #allocation8 [shape = 'u8[8192]{0}', space=vmem, size = 0x2000, scoped, tag = 'input window, operand 2']
    #allocation9 [shape = 'u8[8192]{0}', space=vmem, size = 0x2000, scoped, tag = 'output window, operand 0']
    %8 = vsyncpa [#allocation5], 0
    %9 = vsyncpa [#allocation7], 0
    %10 = vsyncpa [#allocation3], 0
    %s11 = scalar_lea.sflag [#allocation3], 1
    %12 = vsyncpa %s11, 0
    %13 = vsyncpa [#allocation4], 0
    %s14 = scalar_lea.sflag [#allocation4], 1
    %15 = vsyncpa %s14, 0
    loop: start=0, step=1, limit=4
    $region2: #{tpu_custom_call.1} parent=1 // loop_pre_header
      _
    $region3: #{tpu_custom_call.1} parent=1 // loop_header
      %s17 = sphi 0, %s21
      %p18 = scmp.ge.s32.totalorder %s17, 4
      %s24 = sphi 0, %s36
      %s25 = sphi 0, %s32
      %s26 = sphi 0, %s24
      %s27 = sphi 0, %s25
      %s28 = sphi 0, %s26
      %s29 = sphi 0, %s27
      %s37 = sphi 0, %s37
      %s39 = sphi 0, %s37
      %s40 = sphi 0, %s39
      %s54 = sphi 0, %s40
      %s58 = sphi 0, %s58
      %s60 = sphi 0, %s58
      %s61 = sphi 0, %s60
      %s75 = sphi 0, %s61
      %s83 = sphi 0, %s85
      %s86 = sphi 0, %s83
      %s87 = sphi 0, %s86
      %s103 = sphi 0, %s87
      %s111 = sphi 0, %s113
      %s114 = sphi 0, %s111
      %s115 = sphi 0, %s114
      %s131 = sphi 0, %s115
    $region4: #{tpu_custom_call.1} parent=1 // loop_header_branch
      %20 = sbr.rel (%p18) target = $region8
    $region5: #{tpu_custom_call.1} parent=1 // loop_body
      %s22 = ssub.s32 %s17, 1
      %s23 = ssub.s32 %s17, 2
      %s30 = sadd.s32 1, %s25
      %p31 = scmp.ge.s32.totalorder %s30, 1
      %s32 = scalar_select %p31, 0, %s30
      %s33 = sadd.s32 1, %s24
      %s34 = scalar_select %p31, %s33, %s24
      %p35 = scmp.ge.s32.totalorder %s34, 2
      %s36 = scalar_select %p35, 0, %s34
      %s38 = sadd.s32 %s37, 1
      %p41 = scmp.eq.s32.totalorder %s17, 1
      %p42 = scmp.ne.s32.totalorder %s37, %s39
      %p43 = scmp.eq.s32.totalorder %s17, 0
      %p44 = por %p42, %p43
      %p45 = scmp.ne.s32.totalorder %s37, %s39
      %p46 = scmp.eq.s32.totalorder %s22, 1
      %p47 = por %p45, %p46
      %p48 = scmp.ne.s32.totalorder %s39, %s40
      %p49 = scmp.eq.s32.totalorder %s22, 0
      %p50 = por %p48, %p49
      %p51 = scmp.ne.s32.totalorder %s39, %s40
      %p52 = scmp.eq.s32.totalorder %s23, 1
      %p53 = por %p51, %p52
      %p55 = scmp.ne.s32.totalorder %s40, %s54
      %p56 = scmp.eq.s32.totalorder %s23, 0
      %p57 = por %p55, %p56
      %s59 = sadd.s32 %s58, 1
      %p62 = scmp.eq.s32.totalorder %s17, 1
      %p63 = scmp.ne.s32.totalorder %s58, %s60
      %p64 = scmp.eq.s32.totalorder %s17, 0
      %p65 = por %p63, %p64
      %p66 = scmp.ne.s32.totalorder %s58, %s60
      %p67 = scmp.eq.s32.totalorder %s22, 1
      %p68 = por %p66, %p67
      %p69 = scmp.ne.s32.totalorder %s60, %s61
      %p70 = scmp.eq.s32.totalorder %s22, 0
      %p71 = por %p69, %p70
      %p72 = scmp.ne.s32.totalorder %s60, %s61
      %p73 = scmp.eq.s32.totalorder %s23, 1
      %p74 = por %p72, %p73
      %p76 = scmp.ne.s32.totalorder %s61, %s75
      %p77 = scmp.eq.s32.totalorder %s23, 0
      %p78 = por %p76, %p77
      %s79 = ssub.s32 %s24, %s36
      %s80 = ssub.s32 %s25, %s32
      %s81 = sor.u32 %s79, %s80
      %p82 = scmp.eq.s32.totalorder %s81, 0
      %s84 = sadd.s32 %s83, 1
      %s85 = scalar_select %p82, %s83, %s84
      %p88 = pneg %p82
      %p89 = scmp.eq.s32.totalorder %s17, 1
      %p90 = por %p88, %p89
      %p91 = scmp.ne.s32.totalorder %s83, %s86
      %p92 = scmp.eq.s32.totalorder %s17, 0
      %p93 = por %p91, %p92
      %p94 = scmp.ne.s32.totalorder %s83, %s86
      %p95 = scmp.eq.s32.totalorder %s22, 1
      %p96 = por %p94, %p95
      %p97 = scmp.ne.s32.totalorder %s86, %s87
      %p98 = scmp.eq.s32.totalorder %s22, 0
      %p99 = por %p97, %p98
      %p100 = scmp.ne.s32.totalorder %s86, %s87
      %p101 = scmp.eq.s32.totalorder %s23, 1
      %p102 = por %p100, %p101
      %p104 = scmp.ne.s32.totalorder %s87, %s103
      %p105 = scmp.eq.s32.totalorder %s23, 0
      %p106 = por %p104, %p105
      %s107 = ssub.s32 %s24, %s36
      %s108 = ssub.s32 %s25, %s32
      %s109 = sor.u32 %s107, %s108
      %p110 = scmp.eq.s32.totalorder %s109, 0
      %s112 = sadd.s32 %s111, 1
      %s113 = scalar_select %p110, %s111, %s112
      %p116 = pneg %p110
      %p117 = scmp.eq.s32.totalorder %s17, 1
      %p118 = por %p116, %p117
      %p119 = scmp.ne.s32.totalorder %s111, %s114
      %p120 = scmp.eq.s32.totalorder %s17, 0
      %p121 = por %p119, %p120
      %p122 = scmp.ne.s32.totalorder %s111, %s114
      %p123 = scmp.eq.s32.totalorder %s22, 1
      %p124 = por %p122, %p123
      %p125 = scmp.ne.s32.totalorder %s114, %s115
      %p126 = scmp.eq.s32.totalorder %s22, 0
      %p127 = por %p125, %p126
      %p128 = scmp.ne.s32.totalorder %s114, %s115
      %p129 = scmp.eq.s32.totalorder %s23, 1
      %p130 = por %p128, %p129
      %p132 = scmp.ne.s32.totalorder %s115, %s131
      %p133 = scmp.eq.s32.totalorder %s23, 0
      %p134 = por %p132, %p133
      %p135 = scmp.le.s32.totalorder 1, %s17
      %p136 = scmp.lt.s32.totalorder %s17, 3
      %p137 = pnand %p135, %p136
      %p138 = pneg %p137
      // Predicated region
      $region9: #{tpu_custom_call.1} parent=5 // pred_check
        _
      $region10: #{tpu_custom_call.1} parent=5 // pred_check_branch
        %140 = sbr.rel (%p137) target = $region12
      $region11: #{tpu_custom_call.1} parent=5 // pred_region
        %s141 = ssub.s32 %s17, 1
        // Predicated region
        $region13: #{tpu_custom_call.1} parent=11 // pred_check
          %p142 = pneg %p50
        $region14: #{tpu_custom_call.1} parent=11 // pred_check_branch
          %144 = sbr.rel (%p142) target = $region16
        $region15: #{tpu_custom_call.1} parent=11 // pred_region
          %s146 = ssub.s32 64, 64
          %147 = vsyncadd [#allocation5], %s146
          %s149 = sshll.u32 %s0, 4
          %s150 = int_to_ptr.vmem [resolvable:$true] %s149
          %152 = dma.vmem_to_smem %s150, 64, [#allocation2], [#allocation5]
        $region16: #{tpu_custom_call.1} parent=11 // pred_fallthru
          _
        // Predicated region
        $region17: #{tpu_custom_call.1} parent=11 // pred_check
          %p153 = pneg %p71
        $region18: #{tpu_custom_call.1} parent=11 // pred_check_branch
          %155 = sbr.rel (%p153) target = $region20
        $region19: #{tpu_custom_call.1} parent=11 // pred_region
          %s157 = ssub.s32 128, 128
          %158 = vsyncadd [#allocation7], %s157
          %s160 = sshll.u32 %s1, 4
          %s161 = int_to_ptr.vmem [resolvable:$true] %s160
          %163 = dma.vmem_to_smem %s161, 128, [#allocation6], [#allocation7]
        $region20: #{tpu_custom_call.1} parent=11 // pred_fallthru
          _
      $region12: #{tpu_custom_call.1} parent=5 // pred_fallthru
        _
      %p164 = scmp.lt.s32.totalorder %s17, 2
      // Predicated region
      $region21: #{tpu_custom_call.1} parent=5 // pred_check
        %p165 = pneg %p164
      $region22: #{tpu_custom_call.1} parent=5 // pred_check_branch
        %167 = sbr.rel (%p165) target = $region24
      $region23: #{tpu_custom_call.1} parent=5 // pred_region
        // Predicated region
        $region25: #{tpu_custom_call.1} parent=23 // pred_check
          %p168 = pneg %p93
        $region26: #{tpu_custom_call.1} parent=23 // pred_check_branch
          %170 = sbr.rel (%p168) target = $region28
        $region27: #{tpu_custom_call.1} parent=23 // pred_region
          %s171 = sand.u32 %s83, 1
          %s172 = scalar_lea.sflag [#allocation3], %s171
          %s173 = sand.u32 %s83, 1
          %s174 = smul.addr %s173, 8
          %s175 = scalar_lea.vmem [#allocation8], %s174
          %s176 = smul.u32 2, %s25
          %s178 = ssub.s32 128, 128
          %179 = vsyncadd %s172, %s178
          %s180 = smul.addr %s24, 2
          %s181 = sadd.s32 %s176, %s180
          %s182 = smul.addr %s181, 64
          %s183 = scalar_lea.hbm %s2, %s182
          %s185 = sshll.u32 %s175, 4
          %s186 = int_to_ptr.vmem [resolvable:$true] %s185
          %188 = dma.hbm_to_vmem [thread:$0]  %s183, 128, %s186, %s172
        $region28: #{tpu_custom_call.1} parent=23 // pred_fallthru
          _
      $region24: #{tpu_custom_call.1} parent=5 // pred_fallthru
        _
      %p189 = scmp.le.s32.totalorder 1, %s17
      %p190 = scmp.lt.s32.totalorder %s17, 3
      %p191 = pnand %p189, %p190
      %p192 = pneg %p191
      // Predicated region
      $region29: #{tpu_custom_call.1} parent=5 // pred_check
        _
      $region30: #{tpu_custom_call.1} parent=5 // pred_check_branch
        %194 = sbr.rel (%p191) target = $region32
      $region31: #{tpu_custom_call.1} parent=5 // pred_region
        %s195 = ssub.s32 %s17, 1
        // Predicated region
        $region33: #{tpu_custom_call.1} parent=31 // pred_check
          %p196 = pneg %p50
        $region34: #{tpu_custom_call.1} parent=31 // pred_check_branch
          %198 = sbr.rel (%p196) target = $region36
        $region35: #{tpu_custom_call.1} parent=31 // pred_region
          %199 = dma.done [#allocation5], 64
        $region36: #{tpu_custom_call.1} parent=31 // pred_fallthru
          _
        // Predicated region
        $region37: #{tpu_custom_call.1} parent=31 // pred_check
          %p200 = pneg %p71
        $region38: #{tpu_custom_call.1} parent=31 // pred_check_branch
          %202 = sbr.rel (%p200) target = $region40
        $region39: #{tpu_custom_call.1} parent=31 // pred_region
          %203 = dma.done [#allocation7], 128
        $region40: #{tpu_custom_call.1} parent=31 // pred_fallthru
          _
        %s204 = sand.u32 %s86, 1
        %s205 = scalar_lea.sflag [#allocation3], %s204
        %s206 = sand.u32 %s86, 1
        %s207 = smul.addr %s206, 8
        %s208 = scalar_lea.vmem [#allocation8], %s207
        // Predicated region
        $region41: #{tpu_custom_call.1} parent=31 // pred_check
          %p209 = pneg %p99
        $region42: #{tpu_custom_call.1} parent=31 // pred_check_branch
          %211 = sbr.rel (%p209) target = $region44
        $region43: #{tpu_custom_call.1} parent=31 // pred_region
          %212 = dma.done %s205, 128
        $region44: #{tpu_custom_call.1} parent=31 // pred_fallthru
          _
        %213 = sfence
        %p214 = pneg %p50
        %p215 = pneg %p47
        %p216 = pneg %p71
        %p217 = pneg %p68
        %s218 = sand.u32 %s86, 1
        %s219 = scalar_lea.sflag [#allocation3], %s218
        %s220 = sand.u32 %s86, 1
        %s221 = smul.addr %s220, 8
        %s222 = scalar_lea.vmem [#allocation8], %s221
        %p223 = pneg %p99
        %p224 = pneg %p96
        %p225 = pneg %p127
        %p226 = pneg %p124
        %s227 = sand.u32 %s114, 1
        %s228 = scalar_lea.sflag [#allocation4], %s227
        %s229 = sand.u32 %s114, 1
        %s230 = smul.addr %s229, 8
        %s231 = scalar_lea.vmem [#allocation9], %s230
        %s232 = smul.u32 2, %s27
        %s233 = smul.u32 2, %s27
        %v234 = vld [vmem:[%s208] sm:$0xff]
        %s235 = sld [smem:[#allocation2]]
        %v236 = vstv %s235
        %v237 = vmul.f32 %v236, %v234
        %s238 = sld [smem:[#allocation2 + $0x80]]
        %v239 = vstv %s238
        %v240 = vmul.f32 %v239, %v234
        %v242 = vrot.slane %v240, 5
        %v243 = vrot.slane %v242, 4
        %v245 = vadd.f32 %v237, %v243
        %s246 = sld [smem:[#allocation2 + $0x100]]
        %v247 = vstv %s246
        %v248 = vmul.f32 %v247, %v234
        %v250 = vrot.slane %v248, 6
        %v251 = vrot.slane %v250, 4
        %v253 = vadd.f32 %v245, %v251
        %s254 = sld [smem:[#allocation2 + $0x180]]
        %v255 = vstv %s254
        %v256 = vmul.f32 %v255, %v234
        %v258 = vrot.slane %v256, 7
        %v259 = vrot.slane %v258, 4
        %v261 = vadd.f32 %v253, %v259
        %v262 = vmax.f32 %v261, 0.0
        %s263 = sld [smem:[#allocation6]]
        %v264 = vstv %s263
        %v265 = vmul.f32 %v264, %v262
        %s266 = sld [smem:[#allocation2 + $0x1]]
        %v267 = vstv %s266
        %v268 = vmul.f32 %v267, %v234
        %s269 = sld [smem:[#allocation2 + $0x81]]
        %v270 = vstv %s269
        %v271 = vmul.f32 %v270, %v234
        %v273 = vrot.slane %v271, 5
        %v274 = vrot.slane %v273, 4
        %v276 = vadd.f32 %v268, %v274
        %s277 = sld [smem:[#allocation2 + $0x101]]
        %v278 = vstv %s277
        %v279 = vmul.f32 %v278, %v234
        %v281 = vrot.slane %v279, 6
        %v282 = vrot.slane %v281, 4
        %v284 = vadd.f32 %v276, %v282
        %s285 = sld [smem:[#allocation2 + $0x181]]
        %v286 = vstv %s285
        %v287 = vmul.f32 %v286, %v234
        %v289 = vrot.slane %v287, 7
        %v290 = vrot.slane %v289, 4
        %v292 = vadd.f32 %v284, %v290
        %v293 = vmax.f32 %v292, 0.0
        %s294 = sld [smem:[#allocation6 + $0x80]]
        %v295 = vstv %s294
        %v296 = vmul.f32 %v295, %v293
        %v297 = vadd.f32 %v265, %v296
        %s298 = sld [smem:[#allocation2 + $0x2]]
        %v299 = vstv %s298
        %v300 = vmul.f32 %v299, %v234
        %s301 = sld [smem:[#allocation2 + $0x82]]
        %v302 = vstv %s301
        %v303 = vmul.f32 %v302, %v234
        %v305 = vrot.slane %v303, 5
        %v306 = vrot.slane %v305, 4
        %v308 = vadd.f32 %v300, %v306
        %s309 = sld [smem:[#allocation2 + $0x102]]
        %v310 = vstv %s309
        %v311 = vmul.f32 %v310, %v234
        %v313 = vrot.slane %v311, 6
        %v314 = vrot.slane %v313, 4
        %v316 = vadd.f32 %v308, %v314
        %s317 = sld [smem:[#allocation2 + $0x182]]
        %v318 = vstv %s317
        %v319 = vmul.f32 %v318, %v234
        %v321 = vrot.slane %v319, 7
        %v322 = vrot.slane %v321, 4
        %v324 = vadd.f32 %v316, %v322
        %v325 = vmax.f32 %v324, 0.0
        %s326 = sld [smem:[#allocation6 + $0x100]]
        %v327 = vstv %s326
        %v328 = vmul.f32 %v327, %v325
        %v329 = vadd.f32 %v297, %v328
        %s330 = sld [smem:[#allocation2 + $0x3]]
        %v331 = vstv %s330
        %v332 = vmul.f32 %v331, %v234
        %s333 = sld [smem:[#allocation2 + $0x83]]
        %v334 = vstv %s333
        %v335 = vmul.f32 %v334, %v234
        %v337 = vrot.slane %v335, 5
        %v338 = vrot.slane %v337, 4
        %v340 = vadd.f32 %v332, %v338
        %s341 = sld [smem:[#allocation2 + $0x103]]
        %v342 = vstv %s341
        %v343 = vmul.f32 %v342, %v234
        %v345 = vrot.slane %v343, 6
        %v346 = vrot.slane %v345, 4
        %v348 = vadd.f32 %v340, %v346
        %s349 = sld [smem:[#allocation2 + $0x183]]
        %v350 = vstv %s349
        %v351 = vmul.f32 %v350, %v234
        %v353 = vrot.slane %v351, 7
        %v354 = vrot.slane %v353, 4
        %v356 = vadd.f32 %v348, %v354
        %v357 = vmax.f32 %v356, 0.0
        %s358 = sld [smem:[#allocation6 + $0x180]]
        %v359 = vstv %s358
        %v360 = vmul.f32 %v359, %v357
        %v361 = vadd.f32 %v329, %v360
        %s362 = sld [smem:[#allocation2 + $0x4]]
        %v363 = vstv %s362
        %v364 = vmul.f32 %v363, %v234
        %s365 = sld [smem:[#allocation2 + $0x84]]
        %v366 = vstv %s365
        %v367 = vmul.f32 %v366, %v234
        %v369 = vrot.slane %v367, 5
        %v370 = vrot.slane %v369, 4
        %v372 = vadd.f32 %v364, %v370
        %s373 = sld [smem:[#allocation2 + $0x104]]
        %v374 = vstv %s373
        %v375 = vmul.f32 %v374, %v234
        %v377 = vrot.slane %v375, 6
        %v378 = vrot.slane %v377, 4
        %v380 = vadd.f32 %v372, %v378
        %s381 = sld [smem:[#allocation2 + $0x184]]
        %v382 = vstv %s381
        %v383 = vmul.f32 %v382, %v234
        %v385 = vrot.slane %v383, 7
        %v386 = vrot.slane %v385, 4
        %v388 = vadd.f32 %v380, %v386
        %v389 = vmax.f32 %v388, 0.0
        %s390 = sld [smem:[#allocation6 + $0x200]]
        %v391 = vstv %s390
        %v392 = vmul.f32 %v391, %v389
        %v393 = vadd.f32 %v361, %v392
        %s394 = sld [smem:[#allocation2 + $0x5]]
        %v395 = vstv %s394
        %v396 = vmul.f32 %v395, %v234
        %s397 = sld [smem:[#allocation2 + $0x85]]
        %v398 = vstv %s397
        %v399 = vmul.f32 %v398, %v234
        %v401 = vrot.slane %v399, 5
        %v402 = vrot.slane %v401, 4
        %v404 = vadd.f32 %v396, %v402
        %s405 = sld [smem:[#allocation2 + $0x105]]
        %v406 = vstv %s405
        %v407 = vmul.f32 %v406, %v234
        %v409 = vrot.slane %v407, 6
        %v410 = vrot.slane %v409, 4
        %v412 = vadd.f32 %v404, %v410
        %s413 = sld [smem:[#allocation2 + $0x185]]
        %v414 = vstv %s413
        %v415 = vmul.f32 %v414, %v234
        %v417 = vrot.slane %v415, 7
        %v418 = vrot.slane %v417, 4
        %v420 = vadd.f32 %v412, %v418
        %v421 = vmax.f32 %v420, 0.0
        %s422 = sld [smem:[#allocation6 + $0x280]]
        %v423 = vstv %s422
        %v424 = vmul.f32 %v423, %v421
        %v425 = vadd.f32 %v393, %v424
        %s426 = sld [smem:[#allocation2 + $0x6]]
        %v427 = vstv %s426
        %v428 = vmul.f32 %v427, %v234
        %s429 = sld [smem:[#allocation2 + $0x86]]
        %v430 = vstv %s429
        %v431 = vmul.f32 %v430, %v234
        %v433 = vrot.slane %v431, 5
        %v434 = vrot.slane %v433, 4
        %v436 = vadd.f32 %v428, %v434
        %s437 = sld [smem:[#allocation2 + $0x106]]
        %v438 = vstv %s437
        %v439 = vmul.f32 %v438, %v234
        %v441 = vrot.slane %v439, 6
        %v442 = vrot.slane %v441, 4
        %v444 = vadd.f32 %v436, %v442
        %s445 = sld [smem:[#allocation2 + $0x186]]
        %v446 = vstv %s445
        %v447 = vmul.f32 %v446, %v234
        %v449 = vrot.slane %v447, 7
        %v450 = vrot.slane %v449, 4
        %v452 = vadd.f32 %v444, %v450
        %v453 = vmax.f32 %v452, 0.0
        %s454 = sld [smem:[#allocation6 + $0x300]]
        %v455 = vstv %s454
        %v456 = vmul.f32 %v455, %v453
        %v457 = vadd.f32 %v425, %v456
        %s458 = sld [smem:[#allocation2 + $0x7]]
        %v459 = vstv %s458
        %v460 = vmul.f32 %v459, %v234
        %s461 = sld [smem:[#allocation2 + $0x87]]
        %v462 = vstv %s461
        %v463 = vmul.f32 %v462, %v234
        %v465 = vrot.slane %v463, 5
        %v466 = vrot.slane %v465, 4
        %v468 = vadd.f32 %v460, %v466
        %s469 = sld [smem:[#allocation2 + $0x107]]
        %v470 = vstv %s469
        %v471 = vmul.f32 %v470, %v234
        %v473 = vrot.slane %v471, 6
        %v474 = vrot.slane %v473, 4
        %v476 = vadd.f32 %v468, %v474
        %s477 = sld [smem:[#allocation2 + $0x187]]
        %v478 = vstv %s477
        %v479 = vmul.f32 %v478, %v234
        %v481 = vrot.slane %v479, 7
        %v482 = vrot.slane %v481, 4
        %v484 = vadd.f32 %v476, %v482
        %v485 = vmax.f32 %v484, 0.0
        %s486 = sld [smem:[#allocation6 + $0x380]]
        %v487 = vstv %s486
        %v488 = vmul.f32 %v487, %v485
        %v489 = vadd.f32 %v457, %v488
        %v490 = vxor.u32 %v489, 2147483648
        %v491 = vmul.f32 %v490, 1.442695
        %v492 = vpow.pop %v491
        %v493 = vadd.f32 %v492, 1.0
        %v494 = vrcp.pop %v493
        %v495 = vmul.f32 1.0, %v494
        %v497 = vlaneseq
        %v498 = vshrl.u32 %v497, 7
        %v499 = vsub.s32 0, %v498
        %v500 = vrot.slane %v495, %v499
        %v501 = vlaneseq
        %v502 = vshrl.u32 %v501, 7
        %v503 = vsub.s32 4, %v502
        %v504 = vrot.slane %v495, %v503
        %v507 = vlaneseq
        %v508 = vshrl.u32 %v507, 7
        %v509 = vsub.s32 0, %v508
        %v510 = vrot.slane %v500, %v509
        %v511 = vlaneseq
        %v512 = vshrl.u32 %v511, 7
        %v513 = vsub.s32 0, %v512
        %v514 = vrot.slane %v504, %v513
        %v517 = vcombine.low %v510, %v514
        %v519 = vmul.f32 %v234, %v517
        %520 = vst [vmem:[%s231] sm:$0xff] %v519
        %s521 = sand.u32 %s114, 1
        %s522 = scalar_lea.sflag [#allocation4], %s521
        %s523 = sand.u32 %s114, 1
        %s524 = smul.addr %s523, 8
        %s525 = scalar_lea.vmem [#allocation9], %s524
        // Predicated region
        $region45: #{tpu_custom_call.1} parent=31 // pred_check
          %p526 = pneg %p124
        $region46: #{tpu_custom_call.1} parent=31 // pred_check_branch
          %528 = sbr.rel (%p526) target = $region48
        $region47: #{tpu_custom_call.1} parent=31 // pred_region
          %s529 = smul.u32 2, %s27
          %s531 = ssub.s32 128, 128
          %532 = vsyncadd %s522, %s531
          %s533 = smul.addr %s26, 2
          %s534 = sadd.s32 %s529, %s533
          %s535 = smul.addr %s534, 64
          %s536 = scalar_lea.hbm %s3, %s535
          %s538 = sshll.u32 %s525, 4
          %s539 = int_to_ptr.vmem [resolvable:$true] %s538
          %541 = dma.vmem_to_hbm [thread:$0]  %s539, 128, %s536, %s522
        $region48: #{tpu_custom_call.1} parent=31 // pred_fallthru
          _
      $region32: #{tpu_custom_call.1} parent=5 // pred_fallthru
        _
      %p542 = scmp.le.s32.totalorder 2, %s17
      // Predicated region
      $region49: #{tpu_custom_call.1} parent=5 // pred_check
        %p543 = pneg %p542
      $region50: #{tpu_custom_call.1} parent=5 // pred_check_branch
        %545 = sbr.rel (%p543) target = $region52
      $region51: #{tpu_custom_call.1} parent=5 // pred_region
        %s546 = ssub.s32 %s17, 2
        // Predicated region
        $region53: #{tpu_custom_call.1} parent=51 // pred_check
          %p547 = pneg %p130
        $region54: #{tpu_custom_call.1} parent=51 // pred_check_branch
          %549 = sbr.rel (%p547) target = $region56
        $region55: #{tpu_custom_call.1} parent=51 // pred_region
          %s550 = sand.u32 %s115, 1
          %s551 = scalar_lea.sflag [#allocation4], %s550
          %s552 = sand.u32 %s115, 1
          %s553 = smul.addr %s552, 8
          %s554 = scalar_lea.vmem [#allocation9], %s553
          %555 = dma.done %s551, 128
        $region56: #{tpu_custom_call.1} parent=51 // pred_fallthru
          _
      $region52: #{tpu_custom_call.1} parent=5 // pred_fallthru
        _
    $region6: #{tpu_custom_call.1} parent=1 // loop_footer
      %s21 = sadd.s32 1, %s17
    $region7: #{tpu_custom_call.1} parent=1 // loop_footer_branch
      %16 = sbr.rel target = $region3
    $region8: #{tpu_custom_call.1} parent=1 // loop_exit
      _
    %556 = vsyncpa [#allocation3], 1
    %s557 = scalar_lea.sflag [#allocation3], 1
    %558 = vsyncpa %s557, 1
    %559 = vsyncpa [#allocation4], 1
    %s560 = scalar_lea.sflag [#allocation4], 1
    %561 = vsyncpa %s560, 1
    %562 = vsyncpa [#allocation5], 1
    %s563 = scalar_lea.sflag [#allocation5], 1
    %564 = vsyncpa %s563, 1
    %565 = vsyncpa [#allocation7], 1

</llo_original>
